<compile_context>
chip_gen: v5e
topology: v5e:2x2
jax: 0.10.0
libtpu: 0.0.40
codegen_flags: <defaults>
</compile_context>

<pallas_src>
import jax
import jax.numpy as jnp
from jax.experimental import pallas as pl
from jax.experimental.pallas import tpu as pltpu

BN_EPS = 1e-5
LANE = 128
SUBLANE = 8


def _round_up(x, m):
    return (x + m - 1) // m * m


def _compiler_params(needed_bytes, dims=None):
    limit = int(min(64 * 1024 * 1024, max(2 * needed_bytes, 16 * 1024 * 1024)))
    kwargs = dict(vmem_limit_bytes=limit)
    if dims is not None:
        kwargs["dimension_semantics"] = dims
    return pltpu.CompilerParams(**kwargs)


def _pick_batch_tile(B, row_bytes, budget_bytes=20 * 1024 * 1024, cap=2048):
    """Largest multiple-of-8 divisor of B that keeps double-buffered tiles in budget."""
    max_bt = max(SUBLANE, min(cap, budget_bytes // max(row_bytes, 1)))
    for bt in range(min(max_bt, B), SUBLANE - 1, -1):
        if bt % SUBLANE == 0 and B % bt == 0:
            return bt
    return B


# ----------------------------------------------------------------------------
# Fused single-block kernel (small problems: everything fits VMEM at once).
# ----------------------------------------------------------------------------
def _fused_kernel(x_ref, wT_ref, gamma_ref, beta_ref, o_ref):
    # Linear (bias omitted: exactly cancelled by training-mode BN mean-sub).
    y = jnp.dot(x_ref[...], wT_ref[...], preferred_element_type=jnp.float32)

    # BatchNorm1d (training mode): per-feature batch mean / biased variance.
    mean = jnp.mean(y, axis=0, keepdims=True)                    # (1, Np)
    var = jnp.maximum(jnp.mean(y * y, axis=0, keepdims=True) - mean * mean, 0.0)
    inv_std = jax.lax.rsqrt(var + BN_EPS)

    # Fold the affine into per-feature scale/shift: only 2 big-tensor VPU ops.
    scale = gamma_ref[...] * inv_std                             # (1, Np)
    shift = beta_ref[...] - mean * scale                         # (1, Np)
    o_ref[...] = (y * scale + shift).astype(o_ref.dtype)


def _feature_block_fused(x, wT, gamma_p, beta_p):
    B, input_dim = x.shape
    low_p = wT.shape[1]

    def full(shape):
        return pl.BlockSpec(shape, lambda: tuple(0 for _ in shape))

    needed = 4 * (B * input_dim + input_dim * low_p + 2 * B * low_p + 4 * low_p)
    cost = pl.CostEstimate(
        flops=2 * B * input_dim * low_p + 6 * B * low_p,
        transcendentals=low_p,
        bytes_accessed=4 * (B * input_dim + input_dim * low_p + B * low_p + 2 * low_p),
    )
    return pl.pallas_call(
        _fused_kernel,
        out_shape=jax.ShapeDtypeStruct((B, low_p), x.dtype),
        grid=(),
        in_specs=[
            full((B, input_dim)),
            full((input_dim, low_p)),
            full((1, low_p)),
            full((1, low_p)),
        ],
        out_specs=full((B, low_p)),
        compiler_params=_compiler_params(needed),
        cost_estimate=cost,
    )(x, wT, gamma_p, beta_p)


# ----------------------------------------------------------------------------
# Batch-tiled two-phase path (large B: pipelined, v7x 64 MiB VMEM safe).
# ----------------------------------------------------------------------------
def _linear_stats_kernel(x_ref, wT_ref, y_ref, sum_ref, ssq_ref):
    # Per-feature sum / sum-of-squares accumulators live in the (VMEM-resident)
    # output blocks; init on the first batch tile (standard P3 pattern).
    @pl.when(pl.program_id(0) == 0)
    def _():
        sum_ref[...] = jnp.zeros_like(sum_ref)
        ssq_ref[...] = jnp.zeros_like(ssq_ref)

    y = jnp.dot(x_ref[...], wT_ref[...], preferred_element_type=jnp.float32)
    y_ref[...] = y
    sum_ref[...] += jnp.sum(y, axis=0, keepdims=True)
    ssq_ref[...] += jnp.sum(y * y, axis=0, keepdims=True)


def _bn_apply_kernel(y_ref, scale_ref, shift_ref, o_ref):
    o_ref[...] = (y_ref[...] * scale_ref[...] + shift_ref[...]).astype(o_ref.dtype)


def _feature_block_tiled(x, wT, gamma_p, beta_p, bt):
    B, input_dim = x.shape
    low_p = wT.shape[1]
    num_bt = B // bt

    # Phase 1: tiled Linear + batch-stat accumulation (reduction axis -> arbitrary).
    needed1 = 4 * (2 * bt * input_dim + input_dim * low_p + 2 * bt * low_p + 2 * low_p)
    y, s, ssq = pl.pallas_call(
        _linear_stats_kernel,
        out_shape=(
            jax.ShapeDtypeStruct((B, low_p), jnp.float32),
            jax.ShapeDtypeStruct((1, low_p), jnp.float32),
            jax.ShapeDtypeStruct((1, low_p), jnp.float32),
        ),
        grid=(num_bt,),
        in_specs=[
            pl.BlockSpec((bt, input_dim), lambda i: (i, 0)),
            pl.BlockSpec((input_dim, low_p), lambda i: (0, 0)),
        ],
        out_specs=(
            pl.BlockSpec((bt, low_p), lambda i: (i, 0)),
            pl.BlockSpec((1, low_p), lambda i: (0, 0)),
            pl.BlockSpec((1, low_p), lambda i: (0, 0)),
        ),
        compiler_params=_compiler_params(needed1, dims=("arbitrary",)),
        cost_estimate=pl.CostEstimate(
            flops=2 * B * input_dim * low_p + 4 * B * low_p,
            transcendentals=0,
            bytes_accessed=4 * (B * input_dim + input_dim * low_p + B * low_p),
        ),
    )(x, wT)

    # Finalize stats into per-feature scale/shift (tiny (1, low_p) math in XLA).
    inv_b = 1.0 / B
    mean = s * inv_b
    var = jnp.maximum(ssq * inv_b - mean * mean, 0.0)
    scale = gamma_p * jax.lax.rsqrt(var + BN_EPS)
    shift = beta_p - mean * scale

    # Phase 2: normalize each batch tile (independent -> parallel / megacore).
    # Mem-bound: use the largest VMEM-safe tile (amortizes per-step overhead)
    # and alias the phase-1 output buffer as this kernel's output.
    bt2 = _pick_batch_tile(B, row_bytes=4 * 4 * low_p, cap=4096)
    num_bt2 = B // bt2
    needed2 = 4 * (4 * bt2 * low_p + 4 * low_p)
    out = pl.pallas_call(
        _bn_apply_kernel,
        out_shape=jax.ShapeDtypeStruct((B, low_p), x.dtype),
        grid=(num_bt2,),
        in_specs=[
            pl.BlockSpec((bt2, low_p), lambda i: (i, 0)),
            pl.BlockSpec((1, low_p), lambda i: (0, 0)),
            pl.BlockSpec((1, low_p), lambda i: (0, 0)),
        ],
        out_specs=pl.BlockSpec((bt2, low_p), lambda i: (i, 0)),
        input_output_aliases={0: 0},     # write the result in place over y
        compiler_params=_compiler_params(needed2, dims=("parallel",)),
        cost_estimate=pl.CostEstimate(
            flops=2 * B * low_p,
            transcendentals=0,
            bytes_accessed=4 * (2 * B * low_p + 2 * low_p),
        ),
    )(y, scale, shift)
    return out


# ----------------------------------------------------------------------------
# Public wrapper + parameter prep
# ----------------------------------------------------------------------------
def prepare_params(weight, gamma, beta):
    """One-time layout prep: transpose W and pad the feature axis to 128 lanes.

    weight: (low_dim, input_dim) in PyTorch layout.  The Linear bias is NOT
    needed: it is exactly cancelled by training-mode BatchNorm.
    Returns (wT_padded, gamma_padded, beta_padded).
    """
    low_dim, _ = weight.shape
    low_p = _round_up(low_dim, LANE)
    pad = low_p - low_dim
    wT = jnp.pad(weight.T.astype(jnp.float32), ((0, 0), (0, pad)))
    g = jnp.pad(gamma.astype(jnp.float32), (0, pad)).reshape(1, low_p)
    b = jnp.pad(beta.astype(jnp.float32), (0, pad)).reshape(1, low_p)
    return wT, g, b


def feature_block(x, wT, gamma_p, beta_p, low_dim, *, batch_tile=None):
    """x: (B, input_dim); wT/gamma_p/beta_p from prepare_params()."""
    B, input_dim = x.shape
    low_p = wT.shape[1]
    x = x.astype(jnp.float32)

    if batch_tile is None:
        needed = 4 * (B * input_dim + input_dim * low_p + 2 * B * low_p)
        if needed <= 24 * 1024 * 1024:            # fits comfortably on v5e/v6e/v7x
            return _feature_block_fused(x, wT, gamma_p, beta_p)[:, :low_dim]
        # Double-buffered x + y tiles must fit next to the resident weight.
        batch_tile = _pick_batch_tile(B, row_bytes=4 * 2 * (input_dim + low_p))

    assert B % batch_tile == 0 and (batch_tile % SUBLANE == 0 or batch_tile == B), (
        "batch_tile must divide B and be a multiple of 8 (or equal B)")
    return _feature_block_tiled(x, wT, gamma_p, beta_p, batch_tile)[:, :low_dim]


# ----------------------------------------------------------------------------
# Init + pure-JAX reference
# ----------------------------------------------------------------------------
def init_params(key, input_dim, low_dim):
    """Deterministic init matching weights_init_kaiming."""
    k_w, k_g = jax.random.split(key)
    # Linear: kaiming_normal_(a=0, mode='fan_out') -> std = sqrt(2 / fan_out)
    std_w = (2.0 / low_dim) ** 0.5
    weight = std_w * jax.random.normal(k_w, (low_dim, input_dim), jnp.float32)
    bias = jnp.zeros((low_dim,), jnp.float32)     # zeros per init; also a BN no-op
    # BatchNorm1d: weight ~ N(1.0, 0.01), bias = 0
    gamma = 1.0 + 0.01 * jax.random.normal(k_g, (low_dim,), jnp.float32)
    beta = jnp.zeros((low_dim,), jnp.float32)
    return weight, bias, gamma, beta


def feature_block_ref(x, weight, bias, gamma, beta):
    y = x @ weight.T + bias
    mean = jnp.mean(y, axis=0, keepdims=True)
    var = jnp.mean((y - mean) ** 2, axis=0, keepdims=True)
    return gamma * (y - mean) * jax.lax.rsqrt(var + BN_EPS) + beta


if __name__ == "__main__":
    key = jax.random.PRNGKey(0)
    k_x, k_p = jax.random.split(key)

    B, input_dim, low_dim = 16, 32, 16
    x = jax.random.normal(k_x, (B, input_dim), jnp.float32)
    weight, bias, gamma, beta = init_params(k_p, input_dim, low_dim)
    wT, g_p, b_p = prepare_params(weight, gamma, beta)

    ref = feature_block_ref(x, weight, bias, gamma, beta)

    # Path 1: fused single-block kernel (auto-selected at these sizes).
    out_fused = jax.block_until_ready(feature_block(x, wT, g_p, b_p, low_dim))
    # Path 2: batch-tiled two-phase pipeline (forced with a small tile).
    out_tiled = jax.block_until_ready(
        feature_block(x, wT, g_p, b_p, low_dim, batch_tile=8))

    assert out_fused.shape == (B, low_dim)
    assert out_tiled.shape == (B, low_dim)
    assert jnp.allclose(out_fused, ref, atol=1e-4, rtol=1e-4), "fused mismatch"
    assert jnp.allclose(out_tiled, ref, atol=1e-4, rtol=1e-4), "tiled mismatch"

    print("KERNEL_OK")
</pallas_src>

<mosaic_0001>
module attributes {stable_mosaic.version = 11 : i64} {
  func.func @_fused_kernel(%arg0: memref<16x32xf32, #tpu.memory_space<vmem>>, %arg1: memref<32x128xf32, #tpu.memory_space<vmem>>, %arg2: memref<1x128xf32, #tpu.memory_space<vmem>>, %arg3: memref<1x128xf32, #tpu.memory_space<vmem>>, %arg4: memref<16x128xf32, #tpu.memory_space<vmem>>) attributes {dimension_semantics = [], scalar_prefetch = 0 : i64, scratch_operands = 0 : i64, tpu.core_type = #tpu.core_type<tc>} {
    %c0 = arith.constant 0 : index
    %c0_0 = arith.constant 0 : index
    %0 = vector.load %arg0[%c0, %c0_0] : memref<16x32xf32, #tpu.memory_space<vmem>>, vector<16x32xf32>
    %c0_1 = arith.constant 0 : index
    %c0_2 = arith.constant 0 : index
    %1 = vector.load %arg1[%c0_1, %c0_2] : memref<32x128xf32, #tpu.memory_space<vmem>>, vector<32x128xf32>
    %cst = arith.constant dense<0.000000e+00> : vector<16x128xf32>
    %2 = tpu.matmul %0, %1, %cst {dimension_numbers = #tpu.dot_dimension_numbers<[1], [0], [0], [1], [0, 0, 1, 1], [], []>} : vector<16x32xf32>, vector<32x128xf32>, vector<16x128xf32> -> vector<16x128xf32>
    %cst_3 = arith.constant dense<0.000000e+00> : vector<128xf32>
    %3 = vector.multi_reduction <add>, %2, %cst_3 [0] : vector<16x128xf32> to vector<128xf32>
    %4 = vector.shape_cast %3 : vector<128xf32> to vector<1x128xf32>
    %cst_4 = arith.constant 1.600000e+01 : f32
    %5 = vector.broadcast %cst_4 : f32 to vector<1x128xf32>
    %6 = arith.divf %4, %5 : vector<1x128xf32>
    %7 = arith.mulf %2, %2 : vector<16x128xf32>
    %cst_5 = arith.constant dense<0.000000e+00> : vector<128xf32>
    %8 = vector.multi_reduction <add>, %7, %cst_5 [0] : vector<16x128xf32> to vector<128xf32>
    %9 = vector.shape_cast %8 : vector<128xf32> to vector<1x128xf32>
    %cst_6 = arith.constant 1.600000e+01 : f32
    %10 = vector.broadcast %cst_6 : f32 to vector<1x128xf32>
    %11 = arith.divf %9, %10 : vector<1x128xf32>
    %12 = arith.mulf %6, %6 : vector<1x128xf32>
    %13 = arith.subf %11, %12 : vector<1x128xf32>
    %cst_7 = arith.constant 0.000000e+00 : f32
    %14 = vector.broadcast %cst_7 : f32 to vector<1x128xf32>
    %15 = arith.maximumf %13, %14 : vector<1x128xf32>
    %cst_8 = arith.constant 9.99999974E-6 : f32
    %16 = vector.broadcast %cst_8 : f32 to vector<1x128xf32>
    %17 = arith.addf %15, %16 : vector<1x128xf32>
    %18 = math.rsqrt %17 : vector<1x128xf32>
    %c0_9 = arith.constant 0 : index
    %c0_10 = arith.constant 0 : index
    %19 = vector.load %arg2[%c0_9, %c0_10] : memref<1x128xf32, #tpu.memory_space<vmem>>, vector<1x128xf32>
    %20 = arith.mulf %19, %18 : vector<1x128xf32>
    %c0_11 = arith.constant 0 : index
    %c0_12 = arith.constant 0 : index
    %21 = vector.load %arg3[%c0_11, %c0_12] : memref<1x128xf32, #tpu.memory_space<vmem>>, vector<1x128xf32>
    %22 = arith.mulf %6, %20 : vector<1x128xf32>
    %23 = arith.subf %21, %22 : vector<1x128xf32>
    %24 = vector.broadcast %20 : vector<1x128xf32> to vector<16x128xf32>
    %25 = arith.mulf %2, %24 : vector<16x128xf32>
    %26 = vector.broadcast %23 : vector<1x128xf32> to vector<16x128xf32>
    %27 = arith.addf %25, %26 : vector<16x128xf32>
    %c0_13 = arith.constant 0 : index
    %c0_14 = arith.constant 0 : index
    %28 = vector.load %arg4[%c0_13, %c0_14] : memref<16x128xf32, #tpu.memory_space<vmem>>, vector<16x128xf32>
    tpu.vector_store %arg4[%c0_13, %c0_14], %27 {strides = array<i32>} : memref<16x128xf32, #tpu.memory_space<vmem>>, vector<16x128xf32>,
    return
  }
}

</mosaic_0001>

<llo_original>
// kernel: tpu_custom_call.1
$region0: #{tpu_custom_call.1}
  #allocation0 [shape = 'u32[]', space=smem, size = 0x4, offset = 0x4, fixed_abs, tag = 'smem constant byte address 0x4 - core index']
  #allocation1 [shape = 'u32[72,128]{1,0:T(1,128)}', space=vmem, size = 0x9000, scoped, tag = 'internal scratch']
  %s0 = inlined_call_operand.hbm [shape: f32[16,32], index: 0, kind: input, shape index: {}]
  %s1 = inlined_call_operand.hbm [shape: f32[32,128], index: 1, kind: input, shape index: {}]
  %s2 = inlined_call_operand.vmem [shape: f32[1,128], index: 2, kind: input, shape index: {}]
  %s3 = inlined_call_operand.vmem [shape: f32[1,128], index: 3, kind: input, shape index: {}]
  %s4 = inlined_call_operand.hbm [shape: f32[16,128], index: 4, kind: output, shape index: {}]
  %s5 = sld [smem:[#allocation0]]
  $region34: #{tpu_custom_call.1} parent=0
    _
  %s7 = ssub.s32 1, %s5
  %s8 = scalar_select 0, %s7, %s5
  $region1: #{tpu_custom_call.1} parent=0
    #allocation2 [shape = 'u8[8192]{0}', space=vmem, size = 0x2000, scoped, tag = 'input window, operand 0, single buffered']
    #allocation3 [shape = 's32[1]{0}', space=sflag, size = 0x4, scoped, tag = 'scoped memory for tpu_custom_call.1']
    #allocation4 [shape = 's32[1]{0}', space=sflag, size = 0x4, scoped, tag = 'scoped memory for tpu_custom_call.1']
    #allocation5 [shape = 'u8[16384]{0}', space=vmem, size = 0x4000, scoped, tag = 'input window, operand 1, single buffered']
    #allocation6 [shape = 's32[1]{0}', space=sflag, size = 0x4, scoped, tag = 'scoped memory for tpu_custom_call.1']
    #allocation7 [shape = 'u8[8192]{0}', space=vmem, size = 0x2000, scoped, tag = 'output window, operand 0, single buffered']
    %9 = vsyncpa [#allocation3], 0
    %10 = vsyncpa [#allocation6], 0
    %11 = vsyncpa [#allocation4], 0
    // Predicated region
    $region2: #{tpu_custom_call.1} parent=1 // pred_check
      _
    $region3: #{tpu_custom_call.1} parent=1 // pred_check_branch
      %13 = sbr.rel (0) target = $region5
    $region4: #{tpu_custom_call.1} parent=1 // pred_region
      %15 = vsyncadd [#allocation3], 0
      %s16 = sshll.u32 %s0, 4
      %s17 = int_to_ptr.hbm [resolvable:$true] %s16
      %s18 = sshll.u32 [#allocation2], 4
      %s19 = int_to_ptr.vmem [resolvable:$true] %s18
      %24 = dma.hbm_to_vmem [thread:$0]  %s17, 256, %s19, [#allocation3], 128, 128, 8
    $region5: #{tpu_custom_call.1} parent=1 // pred_fallthru
      _
    // Predicated region
    $region6: #{tpu_custom_call.1} parent=1 // pred_check
      _
    $region7: #{tpu_custom_call.1} parent=1 // pred_check_branch
      %26 = sbr.rel (0) target = $region9
    $region8: #{tpu_custom_call.1} parent=1 // pred_region
      %28 = vsyncadd [#allocation6], 0
      %s29 = sshll.u32 %s1, 4
      %s30 = int_to_ptr.hbm [resolvable:$true] %s29
      %s31 = sshll.u32 [#allocation5], 4
      %s32 = int_to_ptr.vmem [resolvable:$true] %s31
      %37 = dma.hbm_to_vmem [thread:$0]  %s30, 512, %s32, [#allocation6], 128, 128, 8
    $region9: #{tpu_custom_call.1} parent=1 // pred_fallthru
      _
    // Predicated region
    $region10: #{tpu_custom_call.1} parent=1 // pred_check
      _
    $region11: #{tpu_custom_call.1} parent=1 // pred_check_branch
      %39 = sbr.rel (0) target = $region13
    $region12: #{tpu_custom_call.1} parent=1 // pred_region
      _
    $region13: #{tpu_custom_call.1} parent=1 // pred_fallthru
      _
    // Predicated region
    $region14: #{tpu_custom_call.1} parent=1 // pred_check
      _
    $region15: #{tpu_custom_call.1} parent=1 // pred_check_branch
      %41 = sbr.rel (0) target = $region17
    $region16: #{tpu_custom_call.1} parent=1 // pred_region
      _
    $region17: #{tpu_custom_call.1} parent=1 // pred_fallthru
      _
    // Predicated region
    $region18: #{tpu_custom_call.1} parent=1 // pred_check
      _
    $region19: #{tpu_custom_call.1} parent=1 // pred_check_branch
      %43 = sbr.rel (0) target = $region21
    $region20: #{tpu_custom_call.1} parent=1 // pred_region
      %45 = dma.done [#allocation3], 256
    $region21: #{tpu_custom_call.1} parent=1 // pred_fallthru
      _
    // Predicated region
    $region22: #{tpu_custom_call.1} parent=1 // pred_check
      _
    $region23: #{tpu_custom_call.1} parent=1 // pred_check_branch
      %47 = sbr.rel (0) target = $region25
    $region24: #{tpu_custom_call.1} parent=1 // pred_region
      %49 = dma.done [#allocation6], 512
    $region25: #{tpu_custom_call.1} parent=1 // pred_fallthru
      _
    %v50 = vld [vmem:[#allocation2] sm:$0xff]
    %v51 = vld [vmem:[#allocation2 + $0x8] sm:$0xff]
    %v52 = vld [vmem:[#allocation5] sm:$0xff]
    %v53 = vld [vmem:[#allocation5 + $0x8] sm:$0xff]
    %v54 = vld [vmem:[#allocation5 + $0x10] sm:$0xff]
    %v55 = vld [vmem:[#allocation5 + $0x18] sm:$0xff]
    %vm56 = vcmask 261120
    %v58 = vsel %vm56, %v50, 0
    %v61 = vsel %vm56, %v51, 0
    %63 = vmatpush.msra.mxu0 0.0
    %64 = vmatpush.msra.mxu0 0.0
    %65 = vmatpush.msra.mxu0 0.0
    %66 = vmatpush.msra.mxu0 0.0
    %67 = vmatpush.msra.mxu0 0.0
    %68 = vmatpush.msra.mxu0 0.0
    %69 = vmatpush.msra.mxu0 0.0
    %70 = vmatpush.msra.mxu0 0.0
    %71 = vmatpush.msra.mxu0 0.0
    %72 = vmatpush.msra.mxu0 0.0
    %73 = vmatpush.msra.mxu0 0.0
    %74 = vmatpush.msra.mxu0 0.0
    %75 = vmatpush.msra.mxu0 %v55
    %76 = vmatpush.msra.mxu0 %v54
    %77 = vmatpush.msra.mxu0 %v53
    %78 = vmatpush.msra.mxu0 %v52
    %79 = vmatmul.f32.gmra.mxu0 %v58
    %v80 = vpop.f32.mrf.mxu0
    %v81 = vadd.f32 0.0, %v80
    %82 = vmatmul.f32.gmra.mxu0 %v61
    %v83 = vpop.f32.mrf.mxu0
    %v84 = vadd.f32 0.0, %v83
    %85 = vdwg.mxu0
    %v86 = vadd.f32 %v81, %v84
    %v87 = vrot.slane %v86, 4
    %v88 = vadd.f32 %v86, %v87
    %v89 = vrot.slane %v88, 2
    %v90 = vadd.f32 %v88, %v89
    %v91 = vrot.slane %v90, 1
    %v92 = vadd.f32 %v90, %v91
    %v93 = vrcp.pop 16.0
    %v94 = vmul.f32 16.0, %v93
    %v95 = vsub.f32 1.0, %v94
    %v96 = vmul.f32 %v93, %v95
    %v97 = vadd.f32 %v93, %v96
    %vm98 = vweird.f32 %v93
    %v99 = vsel %vm98, %v93, %v97
    %v100 = vmul.f32 %v92, %v99
    %v101 = vmul.f32 %v81, %v81
    %v102 = vmul.f32 %v84, %v84
    %v103 = vadd.f32 %v101, %v102
    %v104 = vrot.slane %v103, 4
    %v105 = vadd.f32 %v103, %v104
    %v106 = vrot.slane %v105, 2
    %v107 = vadd.f32 %v105, %v106
    %v108 = vrot.slane %v107, 1
    %v109 = vadd.f32 %v107, %v108
    %v110 = vmul.f32 %v109, %v99
    %v111 = vmul.f32 %v100, %v100
    %v112 = vsub.f32 %v110, %v111
    %v113 = vmax.f32 %v112, 0.0
    %v114 = vadd.f32 %v113, 1e-05
    %v115 = vrsqrt.pop %v114
    %v116 = vmul.f32 %v115, %v114
    %v117 = vmul.f32 %v116, %v115
    %v118 = vmul.f32 0.5, %v117
    %v119 = vsub.f32 1.5, %v118
    %v120 = vmul.f32 %v115, %v119
    %vm121 = vweird.f32 %v114
    %vm122 = vweird.f32 %v115
    %vm123 = vmor %vm121, %vm122
    %v124 = vsel %vm123, %v115, %v120
    %v125 = vld [vmem:[%s2] sm:$0x1]
    %v126 = vmul.f32 %v125, %v124
    %v127 = vld [vmem:[%s3] sm:$0x1]
    %v128 = vmul.f32 %v100, %v126
    %v129 = vsub.f32 %v127, %v128
    %v131 = vperm.slane %v126, 0
    %v133 = vmul.f32 %v81, %v131
    %v134 = vmul.f32 %v84, %v131
    %v136 = vperm.slane %v129, 0
    %v138 = vadd.f32 %v133, %v136
    %v139 = vadd.f32 %v134, %v136
    %140 = vst [vmem:[#allocation7] sm:$0xff] %v138
    %141 = vst [vmem:[#allocation7 + $0x8] sm:$0xff] %v139
    // Predicated region
    $region26: #{tpu_custom_call.1} parent=1 // pred_check
      _
    $region27: #{tpu_custom_call.1} parent=1 // pred_check_branch
      %143 = sbr.rel (0) target = $region29
    $region28: #{tpu_custom_call.1} parent=1 // pred_region
      %145 = vsyncadd [#allocation4], 0
      %s146 = sshll.u32 [#allocation7], 4
      %s147 = int_to_ptr.vmem [resolvable:$true] %s146
      %s148 = sshll.u32 %s4, 4
      %s149 = int_to_ptr.hbm [resolvable:$true] %s148
      %154 = dma.vmem_to_hbm [thread:$0]  %s147, 256, %s149, [#allocation4], 128, 128, 8
    $region29: #{tpu_custom_call.1} parent=1 // pred_fallthru
      _
    // Predicated region
    $region30: #{tpu_custom_call.1} parent=1 // pred_check
      _
    $region31: #{tpu_custom_call.1} parent=1 // pred_check_branch
      %156 = sbr.rel (0) target = $region33
    $region32: #{tpu_custom_call.1} parent=1 // pred_region
      %158 = dma.done [#allocation4], 256
    $region33: #{tpu_custom_call.1} parent=1 // pred_fallthru
      _
    %159 = vsyncpa [#allocation3], 1
    %160 = vsyncpa [#allocation6], 1
    %161 = vsyncpa [#allocation4], 1

</llo_original>
